<compile_context>
chip_gen: v5e
topology: v5e:2x2
jax: 0.10.0
libtpu: 0.0.40
codegen_flags: <defaults>
</compile_context>

<pallas_src>
import functools

import jax
import jax.numpy as jnp
from jax import lax
from jax.experimental import pallas as pl
from jax.experimental.pallas import tpu as pltpu

LANES = 128  # lane width for lane-dense output slabs


# ----------------------------------------------------------------------------
# Pallas kernel: weighted-mean pooling + Bilinear + per-row CrossEntropy nll
# ----------------------------------------------------------------------------
def _biencoder_head_kernel(h1_ref, h2_ref, mb1_ref, mb2_ref, m1_ref, m2_ref,
                           w2_ref, bias_ref, lbl_ref,
                           logits_ref, nll_ref, *, num_classes):
    hidden = w2_ref.shape[0]
    bt, lanes = logits_ref.shape

    # ---- weighted-sum pooling: one 2-D MXU matmul per encoder output -------
    # mb is a block-diagonal 0/1 mask built host-side, so
    #   (mb @ h_flat)[b, :] == sum_s mask[b, s] * h[b, s, :]
    # bf16 operands, f32 accumulation; the [Bt*S, H] tile is never upcast.
    sum1 = jnp.dot(mb1_ref[...], h1_ref[...],
                   preferred_element_type=jnp.float32)          # [Bt, H]
    sum2 = jnp.dot(mb2_ref[...], h2_ref[...],
                   preferred_element_type=jnp.float32)          # [Bt, H]

    # Denominators from the exact f32 masks (matches the reference, which
    # divides in f32).  No zero-guard: an all-zero attention-mask row NaNs
    # exactly like the PyTorch reference would.
    denom1 = jnp.sum(m1_ref[...], axis=1, keepdims=True)        # [Bt, 1]
    denom2 = jnp.sum(m2_ref[...], axis=1, keepdims=True)
    e1 = sum1 / denom1                                          # [Bt, H] f32
    e2 = sum2 / denom2                                          # [Bt, H] f32

    # ---- fused bilinear: single [Bt,H] @ [H, C*H] MXU matmul ----------------
    # (weight pre-reshaped host-side; no per-class transposes)
    t = jnp.dot(e1.astype(w2_ref.dtype), w2_ref[...],
                preferred_element_type=jnp.float32)             # [Bt, C*H]

    lane_ids = lax.broadcasted_iota(jnp.int32, (bt, lanes), 1)
    slab = jnp.zeros((bt, lanes), jnp.float32)
    for c in range(num_classes):                                # static, tiny C
        # per-class dot(u_c, e2): lane-aligned slice + VPU mul + lane reduce
        col = jnp.sum(t[:, c * hidden:(c + 1) * hidden] * e2,
                      axis=1, keepdims=True)                    # [Bt, 1]
        slab = jnp.where(lane_ids == c, col, slab)              # lane-dense place
    slab = slab + bias_ref[...]                                 # bias padded to 128
    logits_ref[...] = slab                                      # full unmasked vst

    # ---- cross-entropy: per-row nll (batch mean happens in the wrapper so
    # the batch grid axis can stay "parallel") -------------------------------
    valid = lane_ids < num_classes
    labels = lbl_ref[...]                                       # [Bt, 1] int32
    masked = jnp.where(valid, slab, -jnp.inf)
    mx = jnp.max(masked, axis=1, keepdims=True)                 # [Bt, 1]
    p = jnp.where(valid, jnp.exp(slab - mx), 0.0)
    lse = mx + jnp.log(jnp.sum(p, axis=1, keepdims=True))       # [Bt, 1]
    onehot = (lane_ids == labels).astype(jnp.float32)           # 0 at lanes >= C
    target = jnp.sum(onehot * slab, axis=1, keepdims=True)      # [Bt, 1]
    nll = lse - target
    nll_ref[...] = jnp.broadcast_to(nll, (bt, lanes))           # lane-dense store


# ----------------------------------------------------------------------------
# Wrapper: layout plumbing + pallas_call
# ----------------------------------------------------------------------------
def biencoder_head(h1, h2, mask1, mask2, bilinear_w, bilinear_b, labels,
                   *, block_b=8):
    """Pooling + bilinear + CE loss for the BiEncoder head as one Pallas call."""
    B, S, H = h1.shape
    C = bilinear_w.shape[0]
    cdtype = jnp.bfloat16

    # Pad batch to a multiple of the batch tile. Padded rows get all-ones masks
    # (avoids 0-denominators) and are excluded from logits / the loss mean.
    Bp = ((B + block_b - 1) // block_b) * block_b
    pad = Bp - B
    if pad:
        h1 = jnp.pad(h1, ((0, pad), (0, 0), (0, 0)))
        h2 = jnp.pad(h2, ((0, pad), (0, 0), (0, 0)))
        mask1 = jnp.pad(mask1, ((0, pad), (0, 0)), constant_values=1.0)
        mask2 = jnp.pad(mask2, ((0, pad), (0, 0)), constant_values=1.0)
        labels = jnp.pad(labels, (0, pad))

    h1c = h1.astype(cdtype)
    h2c = h2.astype(cdtype)
    m1_f32 = mask1.astype(jnp.float32)
    m2_f32 = mask2.astype(jnp.float32)

    # Flatten hidden states so pooling is a plain 2-D matmul in the kernel.
    h1_flat = h1c.reshape(Bp * S, H)
    h2_flat = h2c.reshape(Bp * S, H)

    # Block-diagonal pooling masks: mb[b, (b % block_b) * S + s] = mask[b, s].
    row_mod = jnp.arange(Bp) % block_b
    eye = (row_mod[:, None] == jnp.arange(block_b)[None, :]).astype(jnp.float32)
    mb1 = (eye[:, :, None] * m1_f32[:, None, :]).reshape(Bp, block_b * S).astype(cdtype)
    mb2 = (eye[:, :, None] * m2_f32[:, None, :]).reshape(Bp, block_b * S).astype(cdtype)

    # Fused bilinear weight: w2[i, c*H + j] = W[c, i, j]  ->  [H, C*H], bf16.
    # (At production H this tile should be K-blocked / streamed instead of
    #  kept fully VMEM-resident; at these sizes it fits comfortably.)
    w2 = jnp.transpose(bilinear_w, (1, 0, 2)).reshape(H, C * H).astype(cdtype)

    # Bias padded to a lane-dense [1, 128] slab.
    bias_pad = jnp.zeros((1, LANES), jnp.float32).at[0, :C].set(
        bilinear_b.astype(jnp.float32))

    labels2d = labels.reshape(Bp, 1).astype(jnp.int32)

    grid = (Bp // block_b,)
    kernel = functools.partial(_biencoder_head_kernel, num_classes=C)

    logits_pad, nll_pad = pl.pallas_call(
        kernel,
        out_shape=(
            jax.ShapeDtypeStruct((Bp, LANES), jnp.float32),
            jax.ShapeDtypeStruct((Bp, LANES), jnp.float32),
        ),
        grid_spec=pltpu.PrefetchScalarGridSpec(
            num_scalar_prefetch=0,
            grid=grid,
            in_specs=[
                pl.BlockSpec((block_b * S, H), lambda i: (i, 0)),        # h1_flat
                pl.BlockSpec((block_b * S, H), lambda i: (i, 0)),        # h2_flat
                pl.BlockSpec((block_b, block_b * S), lambda i: (i, 0)),  # mb1
                pl.BlockSpec((block_b, block_b * S), lambda i: (i, 0)),  # mb2
                pl.BlockSpec((block_b, S), lambda i: (i, 0)),            # m1 (f32)
                pl.BlockSpec((block_b, S), lambda i: (i, 0)),            # m2 (f32)
                pl.BlockSpec((H, C * H), lambda i: (0, 0)),              # w2 (resident)
                pl.BlockSpec((1, LANES), lambda i: (0, 0)),              # bias slab
                pl.BlockSpec((block_b, 1), lambda i: (i, 0)),            # labels
            ],
            out_specs=[
                pl.BlockSpec((block_b, LANES), lambda i: (i, 0)),        # logits slab
                pl.BlockSpec((block_b, LANES), lambda i: (i, 0)),        # nll slab
            ],
        ),
        compiler_params=pltpu.CompilerParams(
            dimension_semantics=("parallel",),
            vmem_limit_bytes=32 * 1024 * 1024,
        ),
    )(h1_flat, h2_flat, mb1, mb2, m1_f32, m2_f32, w2, bias_pad, labels2d)

    logits = logits_pad[:B, :C]
    loss = jnp.mean(nll_pad[:B, 0])   # mean over the TRUE batch size
    return logits, loss


# ----------------------------------------------------------------------------
# Glue: tiny deterministic stand-in encoder + pure-JAX reference
# ----------------------------------------------------------------------------
# TODO(synk): the external `encoder_model` transformer is not reproduced here;
#             a toy embedding+linear+tanh encoder stands in for it.
def toy_encoder(input_ids, embed_table, w_enc, b_enc):
    x = embed_table[input_ids]                    # [B, S, H]
    return jnp.tanh(x @ w_enc + b_enc)            # last_hidden_state [B, S, H]


def reference_head(h1, h2, mask1, mask2, w, b, labels):
    """Pure-JAX (f32) reference for the Pallas kernel."""
    def wmean(h, m):
        m = m[..., None].astype(jnp.float32)
        return (h.astype(jnp.float32) * m).sum(axis=1) / m.sum(axis=1)
    e1 = wmean(h1, mask1)
    e2 = wmean(h2, mask2)
    logits = jnp.einsum("bi,cij,bj->bc", e1, w.astype(jnp.float32), e2) + b[None, :]
    logz = jax.nn.logsumexp(logits, axis=1)
    nll = logz - jnp.take_along_axis(logits, labels[:, None], axis=1)[:, 0]
    return logits, jnp.mean(nll)


if __name__ == "__main__":
    B, S, H, C, VOCAB = 12, 8, 128, 2, 50

    key = jax.random.PRNGKey(0)
    (k_emb, k_we, k_be, k_ids1, k_ids2,
     k_w, k_b, k_len1, k_len2, k_lbl) = jax.random.split(key, 10)

    # Deterministic stand-in encoder params.
    embed_table = jax.random.normal(k_emb, (VOCAB, H), jnp.float32) * 0.1
    w_enc = jax.random.normal(k_we, (H, H), jnp.float32) * 0.1
    b_enc = jax.random.normal(k_be, (H,), jnp.float32) * 0.1

    # Bilinear params (torch default init: U(-1/sqrt(H), 1/sqrt(H))).
    bound = 1.0 / jnp.sqrt(jnp.float32(H))
    bilinear_w = jax.random.uniform(k_w, (C, H, H), jnp.float32, -bound, bound)
    bilinear_b = jax.random.uniform(k_b, (C,), jnp.float32, -bound, bound)
    # Round-trip through bf16 once so kernel (bf16 weights) and reference see
    # identical weight values; remaining diff is accumulation order + e1 cast.
    bilinear_w = bilinear_w.astype(jnp.bfloat16).astype(jnp.float32)

    # Example inputs (token ids + attention masks with some padding).
    ids1 = jax.random.randint(k_ids1, (B, S), 0, VOCAB)
    ids2 = jax.random.randint(k_ids2, (B, S), 0, VOCAB)
    lens1 = jax.random.randint(k_len1, (B,), 1, S + 1)
    lens2 = jax.random.randint(k_len2, (B,), 1, S + 1)
    pos = jnp.arange(S)[None, :]
    mask1 = (pos < lens1[:, None]).astype(jnp.float32)   # [B, S]
    mask2 = (pos < lens2[:, None]).astype(jnp.float32)   # [B, S]
    labels = jax.random.randint(k_lbl, (B,), 0, C)

    # Encoder (glue, plain JAX); hidden states handed to the head in bf16.
    h1 = toy_encoder(ids1, embed_table, w_enc, b_enc).astype(jnp.bfloat16)
    h2 = toy_encoder(ids2, embed_table, w_enc, b_enc).astype(jnp.bfloat16)

    # Pallas kernel: pooling + bilinear + cross-entropy.
    logits, loss = biencoder_head(h1, h2, mask1, mask2,
                                  bilinear_w, bilinear_b, labels)
    jax.block_until_ready((logits, loss))

    # Check against the pure-JAX reference (same bf16 inputs, f32 math).
    ref_logits, ref_loss = reference_head(h1, h2, mask1, mask2,
                                          bilinear_w, bilinear_b, labels)
    assert jnp.allclose(logits, ref_logits, atol=2e-2, rtol=2e-2), (logits, ref_logits)
    assert jnp.allclose(loss, ref_loss, atol=2e-2, rtol=2e-2), (loss, ref_loss)

    print("KERNEL_OK")
</pallas_src>

<mosaic_0001>
module attributes {stable_mosaic.version = 11 : i64} {
  func.func @_biencoder_head_kernel(%arg0: i32, %arg1: memref<64x128xbf16, #tpu.memory_space<vmem>>, %arg2: memref<64x128xbf16, #tpu.memory_space<vmem>>, %arg3: memref<8x64xbf16, #tpu.memory_space<vmem>>, %arg4: memref<8x64xbf16, #tpu.memory_space<vmem>>, %arg5: memref<8x8xf32, #tpu.memory_space<vmem>>, %arg6: memref<8x8xf32, #tpu.memory_space<vmem>>, %arg7: memref<128x256xbf16, #tpu.memory_space<vmem>>, %arg8: memref<1x128xf32, #tpu.memory_space<vmem>>, %arg9: memref<8x1xi32, #tpu.memory_space<vmem>>, %arg10: memref<8x128xf32, #tpu.memory_space<vmem>>, %arg11: memref<8x128xf32, #tpu.memory_space<vmem>>) attributes {dimension_semantics = [#tpu.dimension_semantics<parallel>], iteration_bounds = array<i64: 2>, scalar_prefetch = 0 : i64, scratch_operands = 0 : i64, tpu.core_type = #tpu.core_type<tc>, window_params = [{transform_indices = @transform_0, window_bounds = array<i64: 64, 128>}, {transform_indices = @transform_1, window_bounds = array<i64: 64, 128>}, {transform_indices = @transform_2, window_bounds = array<i64: 8, 64>}, {transform_indices = @transform_3, window_bounds = array<i64: 8, 64>}, {transform_indices = @transform_4, window_bounds = array<i64: 8, 8>}, {transform_indices = @transform_5, window_bounds = array<i64: 8, 8>}, {pipeline_mode = #tpu.pipeline_mode<synchronous>, transform_indices = @transform_6, window_bounds = array<i64: 128, 256>}, {pipeline_mode = #tpu.pipeline_mode<synchronous>, transform_indices = @transform_7, window_bounds = array<i64: 1, 128>}, {transform_indices = @transform_8, window_bounds = array<i64: 8, 1>}, {transform_indices = @transform_9, window_bounds = array<i64: 8, 128>}, {transform_indices = @transform_10, window_bounds = array<i64: 8, 128>}]} {
    %c0 = arith.constant 0 : index
    %c0_0 = arith.constant 0 : index
    %0 = vector.load %arg3[%c0, %c0_0] : memref<8x64xbf16, #tpu.memory_space<vmem>>, vector<8x64xbf16>
    %c0_1 = arith.constant 0 : index
    %c0_2 = arith.constant 0 : index
    %1 = vector.load %arg1[%c0_1, %c0_2] : memref<64x128xbf16, #tpu.memory_space<vmem>>, vector<64x128xbf16>
    %cst = arith.constant dense<0.000000e+00> : vector<8x128xf32>
    %2 = tpu.matmul %0, %1, %cst {dimension_numbers = #tpu.dot_dimension_numbers<[1], [0], [0], [1], [0, 0, 1, 1], [], []>} : vector<8x64xbf16>, vector<64x128xbf16>, vector<8x128xf32> -> vector<8x128xf32>
    %c0_3 = arith.constant 0 : index
    %c0_4 = arith.constant 0 : index
    %3 = vector.load %arg4[%c0_3, %c0_4] : memref<8x64xbf16, #tpu.memory_space<vmem>>, vector<8x64xbf16>
    %c0_5 = arith.constant 0 : index
    %c0_6 = arith.constant 0 : index
    %4 = vector.load %arg2[%c0_5, %c0_6] : memref<64x128xbf16, #tpu.memory_space<vmem>>, vector<64x128xbf16>
    %cst_7 = arith.constant dense<0.000000e+00> : vector<8x128xf32>
    %5 = tpu.matmul %3, %4, %cst_7 {dimension_numbers = #tpu.dot_dimension_numbers<[1], [0], [0], [1], [0, 0, 1, 1], [], []>} : vector<8x64xbf16>, vector<64x128xbf16>, vector<8x128xf32> -> vector<8x128xf32>
    %c0_8 = arith.constant 0 : index
    %c0_9 = arith.constant 0 : index
    %6 = vector.load %arg5[%c0_8, %c0_9] : memref<8x8xf32, #tpu.memory_space<vmem>>, vector<8x8xf32>
    %cst_10 = arith.constant dense<0.000000e+00> : vector<8xf32>
    %7 = vector.multi_reduction <add>, %6, %cst_10 [1] : vector<8x8xf32> to vector<8xf32>
    %8 = vector.shape_cast %7 : vector<8xf32> to vector<8x1xf32>
    %c0_11 = arith.constant 0 : index
    %c0_12 = arith.constant 0 : index
    %9 = vector.load %arg6[%c0_11, %c0_12] : memref<8x8xf32, #tpu.memory_space<vmem>>, vector<8x8xf32>
    %cst_13 = arith.constant dense<0.000000e+00> : vector<8xf32>
    %10 = vector.multi_reduction <add>, %9, %cst_13 [1] : vector<8x8xf32> to vector<8xf32>
    %11 = vector.shape_cast %10 : vector<8xf32> to vector<8x1xf32>
    %12 = vector.broadcast %8 : vector<8x1xf32> to vector<8x128xf32>
    %13 = arith.divf %2, %12 : vector<8x128xf32>
    %14 = vector.broadcast %11 : vector<8x1xf32> to vector<8x128xf32>
    %15 = arith.divf %5, %14 : vector<8x128xf32>
    %16 = arith.truncf %13 : vector<8x128xf32> to vector<8x128xbf16>
    %c0_14 = arith.constant 0 : index
    %c0_15 = arith.constant 0 : index
    %17 = vector.load %arg7[%c0_14, %c0_15] : memref<128x256xbf16, #tpu.memory_space<vmem>>, vector<128x256xbf16>
    %cst_16 = arith.constant dense<0.000000e+00> : vector<8x256xf32>
    %18 = tpu.matmul %16, %17, %cst_16 {dimension_numbers = #tpu.dot_dimension_numbers<[1], [0], [0], [1], [0, 0, 1, 1], [], []>} : vector<8x128xbf16>, vector<128x256xbf16>, vector<8x256xf32> -> vector<8x256xf32>
    %19 = tpu.iota {dimensions = array<i32: 1>} : vector<8x128xi32>
    %cst_17 = arith.constant 0.000000e+00 : f32
    %20 = vector.broadcast %cst_17 : f32 to vector<8x128xf32>
    %21 = vector.extract_strided_slice %18 {offsets = [0, 0], sizes = [8, 128], strides = [1, 1]} : vector<8x256xf32> to vector<8x128xf32>
    %22 = arith.mulf %21, %15 : vector<8x128xf32>
    %cst_18 = arith.constant dense<0.000000e+00> : vector<8xf32>
    %23 = vector.multi_reduction <add>, %22, %cst_18 [1] : vector<8x128xf32> to vector<8xf32>
    %24 = vector.shape_cast %23 : vector<8xf32> to vector<8x1xf32>
    %c0_i32 = arith.constant 0 : i32
    %25 = vector.broadcast %c0_i32 : i32 to vector<8x128xi32>
    %26 = arith.cmpi eq, %19, %25 : vector<8x128xi32>
    %27 = vector.shape_cast %24 : vector<8x1xf32> to vector<8x1xf32>
    %28 = vector.broadcast %27 : vector<8x1xf32> to vector<8x128xf32>
    %29 = arith.select %26, %28, %20 : vector<8x128xi1>, vector<8x128xf32>
    %30 = vector.extract_strided_slice %18 {offsets = [0, 128], sizes = [8, 128], strides = [1, 1]} : vector<8x256xf32> to vector<8x128xf32>
    %31 = arith.mulf %30, %15 : vector<8x128xf32>
    %cst_19 = arith.constant dense<0.000000e+00> : vector<8xf32>
    %32 = vector.multi_reduction <add>, %31, %cst_19 [1] : vector<8x128xf32> to vector<8xf32>
    %33 = vector.shape_cast %32 : vector<8xf32> to vector<8x1xf32>
    %c1_i32 = arith.constant 1 : i32
    %34 = vector.broadcast %c1_i32 : i32 to vector<8x128xi32>
    %35 = arith.cmpi eq, %19, %34 : vector<8x128xi32>
    %36 = vector.shape_cast %33 : vector<8x1xf32> to vector<8x1xf32>
    %37 = vector.broadcast %36 : vector<8x1xf32> to vector<8x128xf32>
    %38 = arith.select %35, %37, %29 : vector<8x128xi1>, vector<8x128xf32>
    %c0_20 = arith.constant 0 : index
    %c0_21 = arith.constant 0 : index
    %39 = vector.load %arg8[%c0_20, %c0_21] : memref<1x128xf32, #tpu.memory_space<vmem>>, vector<1x128xf32>
    %40 = vector.broadcast %39 : vector<1x128xf32> to vector<8x128xf32>
    %41 = arith.addf %38, %40 : vector<8x128xf32>
    %c0_22 = arith.constant 0 : index
    %c0_23 = arith.constant 0 : index
    %42 = vector.load %arg10[%c0_22, %c0_23] : memref<8x128xf32, #tpu.memory_space<vmem>>, vector<8x128xf32>
    tpu.vector_store %arg10[%c0_22, %c0_23], %41 {strides = array<i32>} : memref<8x128xf32, #tpu.memory_space<vmem>>, vector<8x128xf32>,
    %c2_i32 = arith.constant 2 : i32
    %43 = vector.broadcast %c2_i32 : i32 to vector<8x128xi32>
    %44 = arith.cmpi slt, %19, %43 : vector<8x128xi32>
    %c0_24 = arith.constant 0 : index
    %c0_25 = arith.constant 0 : index
    %45 = vector.load %arg9[%c0_24, %c0_25] : memref<8x1xi32, #tpu.memory_space<vmem>>, vector<8x1xi32>
    %cst_26 = arith.constant 0xFF800000 : f32
    %46 = vector.broadcast %cst_26 : f32 to vector<8x128xf32>
    %47 = arith.select %44, %41, %46 : vector<8x128xi1>, vector<8x128xf32>
    %cst_27 = arith.constant dense<0xFF800000> : vector<8xf32>
    %48 = vector.multi_reduction <maximumf>, %47, %cst_27 [1] : vector<8x128xf32> to vector<8xf32>
    %49 = vector.shape_cast %48 : vector<8xf32> to vector<8x1xf32>
    %50 = vector.broadcast %49 : vector<8x1xf32> to vector<8x128xf32>
    %51 = arith.subf %41, %50 : vector<8x128xf32>
    %52 = math.exp %51 : vector<8x128xf32>
    %cst_28 = arith.constant 0.000000e+00 : f32
    %53 = vector.broadcast %cst_28 : f32 to vector<8x128xf32>
    %54 = arith.select %44, %52, %53 : vector<8x128xi1>, vector<8x128xf32>
    %cst_29 = arith.constant dense<0.000000e+00> : vector<8xf32>
    %55 = vector.multi_reduction <add>, %54, %cst_29 [1] : vector<8x128xf32> to vector<8xf32>
    %56 = vector.shape_cast %55 : vector<8xf32> to vector<8x1xf32>
    %57 = math.log %56 : vector<8x1xf32>
    %58 = arith.addf %49, %57 : vector<8x1xf32>
    %59 = vector.broadcast %45 : vector<8x1xi32> to vector<8x128xi32>
    %60 = arith.cmpi eq, %19, %59 : vector<8x128xi32>
    %61 = arith.extui %60 : vector<8x128xi1> to vector<8x128xi32>
    %62 = arith.sitofp %61 : vector<8x128xi32> to vector<8x128xf32>
    %63 = arith.mulf %62, %41 : vector<8x128xf32>
    %cst_30 = arith.constant dense<0.000000e+00> : vector<8xf32>
    %64 = vector.multi_reduction <add>, %63, %cst_30 [1] : vector<8x128xf32> to vector<8xf32>
    %65 = vector.shape_cast %64 : vector<8xf32> to vector<8x1xf32>
    %66 = arith.subf %58, %65 : vector<8x1xf32>
    %67 = vector.shape_cast %66 : vector<8x1xf32> to vector<8x1xf32>
    %68 = vector.broadcast %67 : vector<8x1xf32> to vector<8x128xf32>
    %c0_31 = arith.constant 0 : index
    %c0_32 = arith.constant 0 : index
    %69 = vector.load %arg11[%c0_31, %c0_32] : memref<8x128xf32, #tpu.memory_space<vmem>>, vector<8x128xf32>
    tpu.vector_store %arg11[%c0_31, %c0_32], %68 {strides = array<i32>} : memref<8x128xf32, #tpu.memory_space<vmem>>, vector<8x128xf32>,
    return
  }
  func.func @transform_0(%arg0: i32) -> (i32, i32) {
    %c0_i32 = arith.constant 0 : i32
    %c0_i32_0 = arith.constant 0 : i32
    return %arg0, %c0_i32 : i32, i32
  }
  func.func @transform_1(%arg0: i32) -> (i32, i32) {
    %c0_i32 = arith.constant 0 : i32
    %c0_i32_0 = arith.constant 0 : i32
    return %arg0, %c0_i32 : i32, i32
  }
  func.func @transform_2(%arg0: i32) -> (i32, i32) {
    %c0_i32 = arith.constant 0 : i32
    %c0_i32_0 = arith.constant 0 : i32
    return %arg0, %c0_i32 : i32, i32
  }
  func.func @transform_3(%arg0: i32) -> (i32, i32) {
    %c0_i32 = arith.constant 0 : i32
    %c0_i32_0 = arith.constant 0 : i32
    return %arg0, %c0_i32 : i32, i32
  }
  func.func @transform_4(%arg0: i32) -> (i32, i32) {
    %c0_i32 = arith.constant 0 : i32
    %c0_i32_0 = arith.constant 0 : i32
    return %arg0, %c0_i32 : i32, i32
  }
  func.func @transform_5(%arg0: i32) -> (i32, i32) {
    %c0_i32 = arith.constant 0 : i32
    %c0_i32_0 = arith.constant 0 : i32
    return %arg0, %c0_i32 : i32, i32
  }
  func.func @transform_6(%arg0: i32) -> (i32, i32) {
    %c0_i32 = arith.constant 0 : i32
    %c0_i32_0 = arith.constant 0 : i32
    %c0_i32_1 = arith.constant 0 : i32
    return %c0_i32, %c0_i32_0 : i32, i32
  }
  func.func @transform_7(%arg0: i32) -> (i32, i32) {
    %c0_i32 = arith.constant 0 : i32
    %c0_i32_0 = arith.constant 0 : i32
    %c0_i32_1 = arith.constant 0 : i32
    return %c0_i32, %c0_i32_0 : i32, i32
  }
  func.func @transform_8(%arg0: i32) -> (i32, i32) {
    %c0_i32 = arith.constant 0 : i32
    %c0_i32_0 = arith.constant 0 : i32
    return %arg0, %c0_i32 : i32, i32
  }
  func.func @transform_9(%arg0: i32) -> (i32, i32) {
    %c0_i32 = arith.constant 0 : i32
    %c0_i32_0 = arith.constant 0 : i32
    return %arg0, %c0_i32 : i32, i32
  }
  func.func @transform_10(%arg0: i32) -> (i32, i32) {
    %c0_i32 = arith.constant 0 : i32
    %c0_i32_0 = arith.constant 0 : i32
    return %arg0, %c0_i32 : i32, i32
  }
}

</mosaic_0001>

<llo_original>
// kernel: tpu_custom_call.1
$region0: #{tpu_custom_call.1}
  #allocation0 [shape = 'u32[]', space=smem, size = 0x4, offset = 0x4, fixed_abs, tag = 'smem constant byte address 0x4 - core index']
  #allocation1 [shape = 'u32[72,128]{1,0:T(1,128)}', space=vmem, size = 0x9000, scoped, tag = 'internal scratch']
  %s0 = inlined_call_operand.hbm [shape: bf16[128,128], index: 0, kind: input, shape index: {}]
  %s1 = inlined_call_operand.hbm [shape: bf16[128,128], index: 1, kind: input, shape index: {}]
  %s2 = inlined_call_operand.vmem [shape: bf16[16,64], index: 2, kind: input, shape index: {}]
  %s3 = inlined_call_operand.vmem [shape: bf16[16,64], index: 3, kind: input, shape index: {}]
  %s4 = inlined_call_operand.vmem [shape: f32[16,8], index: 4, kind: input, shape index: {}]
  %s5 = inlined_call_operand.vmem [shape: f32[16,8], index: 5, kind: input, shape index: {}]
  %s6 = inlined_call_operand.hbm [shape: bf16[128,256], index: 6, kind: input, shape index: {}]
  %s7 = inlined_call_operand.vmem [shape: f32[1,128], index: 7, kind: input, shape index: {}]
  %s8 = inlined_call_operand.vmem [shape: s32[16,1], index: 8, kind: input, shape index: {}]
  %s9 = inlined_call_operand.hbm [shape: f32[16,128], index: 9, kind: output, shape index: {0}]
  %s10 = inlined_call_operand.hbm [shape: f32[16,128], index: 10, kind: output, shape index: {1}]
  %11 = xla_tuple %s9, %s10
  %s12 = sld [smem:[#allocation0]]
  $region89: #{tpu_custom_call.1} parent=0
    _
  %s14 = ssub.s32 1, %s12
  %s15 = scalar_select 0, %s14, %s12
  $region1: #{tpu_custom_call.1} parent=0
    #allocation2 [shape = 'u8[32768]{0}', space=vmem, size = 0x8000, scoped, tag = 'input window, operand 0']
    #allocation3 [shape = 's32[2]{0}', space=sflag, size = 0x8, scoped, tag = 'scoped memory for tpu_custom_call.1']
    #allocation4 [shape = 's32[2]{0}', space=sflag, size = 0x8, scoped, tag = 'scoped memory for tpu_custom_call.1']
    #allocation5 [shape = 'u8[32768]{0}', space=vmem, size = 0x8000, scoped, tag = 'input window, operand 1']
    #allocation6 [shape = 's32[2]{0}', space=sflag, size = 0x8, scoped, tag = 'scoped memory for tpu_custom_call.1']
    #allocation7 [shape = 'u8[65536]{0}', space=vmem, size = 0x10000, scoped, tag = 'input window, operand 6, single buffered']
    #allocation8 [shape = 'u8[8192]{0}', space=vmem, size = 0x2000, scoped, tag = 'output window, operand 0']
    #allocation9 [shape = 'u8[8192]{0}', space=vmem, size = 0x2000, scoped, tag = 'output window, operand 1']
    #allocation10 [shape = 's32[2]{0}', space=sflag, size = 0x8, scoped, tag = 'scoped memory for tpu_custom_call.1']
    %16 = vsyncpa [#allocation3], 0
    %s17 = scalar_lea.sflag [#allocation3], 1
    %18 = vsyncpa %s17, 0
    %19 = vsyncpa [#allocation6], 0
    %s20 = scalar_lea.sflag [#allocation6], 1
    %21 = vsyncpa %s20, 0
    %22 = vsyncpa [#allocation4], 0
    %s23 = scalar_lea.sflag [#allocation4], 1
    %24 = vsyncpa %s23, 0
    %25 = vsyncpa [#allocation10], 0
    %s26 = scalar_lea.sflag [#allocation10], 1
    %27 = vsyncpa %s26, 0
    loop: start=0, step=1, limit=4
    $region2: #{tpu_custom_call.1} parent=1 // loop_pre_header
      _
    $region3: #{tpu_custom_call.1} parent=1 // loop_header
      %s29 = sphi 0, %s33
      %p30 = scmp.ge.s32.totalorder %s29, 4
      %s39 = sphi 0, %s41
      %s42 = sphi 0, %s39
      %s43 = sphi 0, %s42
      %s59 = sphi 0, %s43
      %s65 = sphi 0, %s67
      %s68 = sphi 0, %s65
      %s69 = sphi 0, %s68
      %s85 = sphi 0, %s69
      %s91 = sphi 0, %s93
      %s94 = sphi 0, %s91
      %s95 = sphi 0, %s94
      %s111 = sphi 0, %s95
      %s117 = sphi 0, %s119
      %s120 = sphi 0, %s117
      %s121 = sphi 0, %s120
      %s137 = sphi 0, %s121
      %s143 = sphi 0, %s145
      %s146 = sphi 0, %s143
      %s147 = sphi 0, %s146
      %s163 = sphi 0, %s147
      %s169 = sphi 0, %s171
      %s172 = sphi 0, %s169
      %s173 = sphi 0, %s172
      %s189 = sphi 0, %s173
      %s193 = sphi 0, %s193
      %s195 = sphi 0, %s193
      %s196 = sphi 0, %s195
      %s210 = sphi 0, %s196
      %s214 = sphi 0, %s214
      %s216 = sphi 0, %s214
      %s217 = sphi 0, %s216
      %s231 = sphi 0, %s217
      %s237 = sphi 0, %s239
      %s240 = sphi 0, %s237
      %s241 = sphi 0, %s240
      %s257 = sphi 0, %s241
      %s263 = sphi 0, %s265
      %s266 = sphi 0, %s263
      %s267 = sphi 0, %s266
      %s283 = sphi 0, %s267
      %s289 = sphi 0, %s291
      %s292 = sphi 0, %s289
      %s293 = sphi 0, %s292
      %s309 = sphi 0, %s293
    $region4: #{tpu_custom_call.1} parent=1 // loop_header_branch
      %32 = sbr.rel (%p30) target = $region8
    $region5: #{tpu_custom_call.1} parent=1 // loop_body
      %s34 = ssub.s32 %s29, 1
      %s35 = ssub.s32 %s29, 2
      %s36 = sadd.s32 %s29, 1
      %s37 = ssub.s32 %s29, %s36
      %p38 = scmp.eq.s32.totalorder %s37, 0
      %s40 = sadd.s32 %s39, 1
      %s41 = scalar_select %p38, %s39, %s40
      %p44 = pneg %p38
      %p45 = scmp.eq.s32.totalorder %s29, 1
      %p46 = por %p44, %p45
      %p47 = scmp.ne.s32.totalorder %s39, %s42
      %p48 = scmp.eq.s32.totalorder %s29, 0
      %p49 = por %p47, %p48
      %p50 = scmp.ne.s32.totalorder %s39, %s42
      %p51 = scmp.eq.s32.totalorder %s34, 1
      %p52 = por %p50, %p51
      %p53 = scmp.ne.s32.totalorder %s42, %s43
      %p54 = scmp.eq.s32.totalorder %s34, 0
      %p55 = por %p53, %p54
      %p56 = scmp.ne.s32.totalorder %s42, %s43
      %p57 = scmp.eq.s32.totalorder %s35, 1
      %p58 = por %p56, %p57
      %p60 = scmp.ne.s32.totalorder %s43, %s59
      %p61 = scmp.eq.s32.totalorder %s35, 0
      %p62 = por %p60, %p61
      %s63 = ssub.s32 %s29, %s36
      %p64 = scmp.eq.s32.totalorder %s63, 0
      %s66 = sadd.s32 %s65, 1
      %s67 = scalar_select %p64, %s65, %s66
      %p70 = pneg %p64
      %p71 = scmp.eq.s32.totalorder %s29, 1
      %p72 = por %p70, %p71
      %p73 = scmp.ne.s32.totalorder %s65, %s68
      %p74 = scmp.eq.s32.totalorder %s29, 0
      %p75 = por %p73, %p74
      %p76 = scmp.ne.s32.totalorder %s65, %s68
      %p77 = scmp.eq.s32.totalorder %s34, 1
      %p78 = por %p76, %p77
      %p79 = scmp.ne.s32.totalorder %s68, %s69
      %p80 = scmp.eq.s32.totalorder %s34, 0
      %p81 = por %p79, %p80
      %p82 = scmp.ne.s32.totalorder %s68, %s69
      %p83 = scmp.eq.s32.totalorder %s35, 1
      %p84 = por %p82, %p83
      %p86 = scmp.ne.s32.totalorder %s69, %s85
      %p87 = scmp.eq.s32.totalorder %s35, 0
      %p88 = por %p86, %p87
      %s89 = ssub.s32 %s29, %s36
      %p90 = scmp.eq.s32.totalorder %s89, 0
      %s92 = sadd.s32 %s91, 1
      %s93 = scalar_select %p90, %s91, %s92
      %p96 = pneg %p90
      %p97 = scmp.eq.s32.totalorder %s29, 1
      %p98 = por %p96, %p97
      %p99 = scmp.ne.s32.totalorder %s91, %s94
      %p100 = scmp.eq.s32.totalorder %s29, 0
      %p101 = por %p99, %p100
      %p102 = scmp.ne.s32.totalorder %s91, %s94
      %p103 = scmp.eq.s32.totalorder %s34, 1
      %p104 = por %p102, %p103
      %p105 = scmp.ne.s32.totalorder %s94, %s95
      %p106 = scmp.eq.s32.totalorder %s34, 0
      %p107 = por %p105, %p106
      %p108 = scmp.ne.s32.totalorder %s94, %s95
      %p109 = scmp.eq.s32.totalorder %s35, 1
      %p110 = por %p108, %p109
      %p112 = scmp.ne.s32.totalorder %s95, %s111
      %p113 = scmp.eq.s32.totalorder %s35, 0
      %p114 = por %p112, %p113
      %s115 = ssub.s32 %s29, %s36
      %p116 = scmp.eq.s32.totalorder %s115, 0
      %s118 = sadd.s32 %s117, 1
      %s119 = scalar_select %p116, %s117, %s118
      %p122 = pneg %p116
      %p123 = scmp.eq.s32.totalorder %s29, 1
      %p124 = por %p122, %p123
      %p125 = scmp.ne.s32.totalorder %s117, %s120
      %p126 = scmp.eq.s32.totalorder %s29, 0
      %p127 = por %p125, %p126
      %p128 = scmp.ne.s32.totalorder %s117, %s120
      %p129 = scmp.eq.s32.totalorder %s34, 1
      %p130 = por %p128, %p129
      %p131 = scmp.ne.s32.totalorder %s120, %s121
      %p132 = scmp.eq.s32.totalorder %s34, 0
      %p133 = por %p131, %p132
      %p134 = scmp.ne.s32.totalorder %s120, %s121
      %p135 = scmp.eq.s32.totalorder %s35, 1
      %p136 = por %p134, %p135
      %p138 = scmp.ne.s32.totalorder %s121, %s137
      %p139 = scmp.eq.s32.totalorder %s35, 0
      %p140 = por %p138, %p139
      %s141 = ssub.s32 %s29, %s36
      %p142 = scmp.eq.s32.totalorder %s141, 0
      %s144 = sadd.s32 %s143, 1
      %s145 = scalar_select %p142, %s143, %s144
      %p148 = pneg %p142
      %p149 = scmp.eq.s32.totalorder %s29, 1
      %p150 = por %p148, %p149
      %p151 = scmp.ne.s32.totalorder %s143, %s146
      %p152 = scmp.eq.s32.totalorder %s29, 0
      %p153 = por %p151, %p152
      %p154 = scmp.ne.s32.totalorder %s143, %s146
      %p155 = scmp.eq.s32.totalorder %s34, 1
      %p156 = por %p154, %p155
      %p157 = scmp.ne.s32.totalorder %s146, %s147
      %p158 = scmp.eq.s32.totalorder %s34, 0
      %p159 = por %p157, %p158
      %p160 = scmp.ne.s32.totalorder %s146, %s147
      %p161 = scmp.eq.s32.totalorder %s35, 1
      %p162 = por %p160, %p161
      %p164 = scmp.ne.s32.totalorder %s147, %s163
      %p165 = scmp.eq.s32.totalorder %s35, 0
      %p166 = por %p164, %p165
      %s167 = ssub.s32 %s29, %s36
      %p168 = scmp.eq.s32.totalorder %s167, 0
      %s170 = sadd.s32 %s169, 1
      %s171 = scalar_select %p168, %s169, %s170
      %p174 = pneg %p168
      %p175 = scmp.eq.s32.totalorder %s29, 1
      %p176 = por %p174, %p175
      %p177 = scmp.ne.s32.totalorder %s169, %s172
      %p178 = scmp.eq.s32.totalorder %s29, 0
      %p179 = por %p177, %p178
      %p180 = scmp.ne.s32.totalorder %s169, %s172
      %p181 = scmp.eq.s32.totalorder %s34, 1
      %p182 = por %p180, %p181
      %p183 = scmp.ne.s32.totalorder %s172, %s173
      %p184 = scmp.eq.s32.totalorder %s34, 0
      %p185 = por %p183, %p184
      %p186 = scmp.ne.s32.totalorder %s172, %s173
      %p187 = scmp.eq.s32.totalorder %s35, 1
      %p188 = por %p186, %p187
      %p190 = scmp.ne.s32.totalorder %s173, %s189
      %p191 = scmp.eq.s32.totalorder %s35, 0
      %p192 = por %p190, %p191
      %s194 = sadd.s32 %s193, 1
      %p197 = scmp.eq.s32.totalorder %s29, 1
      %p198 = scmp.ne.s32.totalorder %s193, %s195
      %p199 = scmp.eq.s32.totalorder %s29, 0
      %p200 = por %p198, %p199
      %p201 = scmp.ne.s32.totalorder %s193, %s195
      %p202 = scmp.eq.s32.totalorder %s34, 1
      %p203 = por %p201, %p202
      %p204 = scmp.ne.s32.totalorder %s195, %s196
      %p205 = scmp.eq.s32.totalorder %s34, 0
      %p206 = por %p204, %p205
      %p207 = scmp.ne.s32.totalorder %s195, %s196
      %p208 = scmp.eq.s32.totalorder %s35, 1
      %p209 = por %p207, %p208
      %p211 = scmp.ne.s32.totalorder %s196, %s210
      %p212 = scmp.eq.s32.totalorder %s35, 0
      %p213 = por %p211, %p212
      %s215 = sadd.s32 %s214, 1
      %p218 = scmp.eq.s32.totalorder %s29, 1
      %p219 = scmp.ne.s32.totalorder %s214, %s216
      %p220 = scmp.eq.s32.totalorder %s29, 0
      %p221 = por %p219, %p220
      %p222 = scmp.ne.s32.totalorder %s214, %s216
      %p223 = scmp.eq.s32.totalorder %s34, 1
      %p224 = por %p222, %p223
      %p225 = scmp.ne.s32.totalorder %s216, %s217
      %p226 = scmp.eq.s32.totalorder %s34, 0
      %p227 = por %p225, %p226
      %p228 = scmp.ne.s32.totalorder %s216, %s217
      %p229 = scmp.eq.s32.totalorder %s35, 1
      %p230 = por %p228, %p229
      %p232 = scmp.ne.s32.totalorder %s217, %s231
      %p233 = scmp.eq.s32.totalorder %s35, 0
      %p234 = por %p232, %p233
      %s235 = ssub.s32 %s29, %s36
      %p236 = scmp.eq.s32.totalorder %s235, 0
      %s238 = sadd.s32 %s237, 1
      %s239 = scalar_select %p236, %s237, %s238
      %p242 = pneg %p236
      %p243 = scmp.eq.s32.totalorder %s29, 1
      %p244 = por %p242, %p243
      %p245 = scmp.ne.s32.totalorder %s237, %s240
      %p246 = scmp.eq.s32.totalorder %s29, 0
      %p247 = por %p245, %p246
      %p248 = scmp.ne.s32.totalorder %s237, %s240
      %p249 = scmp.eq.s32.totalorder %s34, 1
      %p250 = por %p248, %p249
      %p251 = scmp.ne.s32.totalorder %s240, %s241
      %p252 = scmp.eq.s32.totalorder %s34, 0
      %p253 = por %p251, %p252
      %p254 = scmp.ne.s32.totalorder %s240, %s241
      %p255 = scmp.eq.s32.totalorder %s35, 1
      %p256 = por %p254, %p255
      %p258 = scmp.ne.s32.totalorder %s241, %s257
      %p259 = scmp.eq.s32.totalorder %s35, 0
      %p260 = por %p258, %p259
      %s261 = ssub.s32 %s29, %s36
      %p262 = scmp.eq.s32.totalorder %s261, 0
      %s264 = sadd.s32 %s263, 1
      %s265 = scalar_select %p262, %s263, %s264
      %p268 = pneg %p262
      %p269 = scmp.eq.s32.totalorder %s29, 1
      %p270 = por %p268, %p269
      %p271 = scmp.ne.s32.totalorder %s263, %s266
      %p272 = scmp.eq.s32.totalorder %s29, 0
      %p273 = por %p271, %p272
      %p274 = scmp.ne.s32.totalorder %s263, %s266
      %p275 = scmp.eq.s32.totalorder %s34, 1
      %p276 = por %p274, %p275
      %p277 = scmp.ne.s32.totalorder %s266, %s267
      %p278 = scmp.eq.s32.totalorder %s34, 0
      %p279 = por %p277, %p278
      %p280 = scmp.ne.s32.totalorder %s266, %s267
      %p281 = scmp.eq.s32.totalorder %s35, 1
      %p282 = por %p280, %p281
      %p284 = scmp.ne.s32.totalorder %s267, %s283
      %p285 = scmp.eq.s32.totalorder %s35, 0
      %p286 = por %p284, %p285
      %s287 = ssub.s32 %s29, %s36
      %p288 = scmp.eq.s32.totalorder %s287, 0
      %s290 = sadd.s32 %s289, 1
      %s291 = scalar_select %p288, %s289, %s290
      %p294 = pneg %p288
      %p295 = scmp.eq.s32.totalorder %s29, 1
      %p296 = por %p294, %p295
      %p297 = scmp.ne.s32.totalorder %s289, %s292
      %p298 = scmp.eq.s32.totalorder %s29, 0
      %p299 = por %p297, %p298
      %p300 = scmp.ne.s32.totalorder %s289, %s292
      %p301 = scmp.eq.s32.totalorder %s34, 1
      %p302 = por %p300, %p301
      %p303 = scmp.ne.s32.totalorder %s292, %s293
      %p304 = scmp.eq.s32.totalorder %s34, 0
      %p305 = por %p303, %p304
      %p306 = scmp.ne.s32.totalorder %s292, %s293
      %p307 = scmp.eq.s32.totalorder %s35, 1
      %p308 = por %p306, %p307
      %p310 = scmp.ne.s32.totalorder %s293, %s309
      %p311 = scmp.eq.s32.totalorder %s35, 0
      %p312 = por %p310, %p311
      %p313 = scmp.le.s32.totalorder 1, %s29
      %p314 = scmp.lt.s32.totalorder %s29, 3
      %p315 = pnand %p313, %p314
      %p316 = pneg %p315
      // Predicated region
      $region9: #{tpu_custom_call.1} parent=5 // pred_check
        _
      $region10: #{tpu_custom_call.1} parent=5 // pred_check_branch
        %318 = sbr.rel (%p315) target = $region12
      $region11: #{tpu_custom_call.1} parent=5 // pred_region
        %s319 = ssub.s32 %s29, 1
        // Predicated region
        $region13: #{tpu_custom_call.1} parent=11 // pred_check
          %p320 = pneg %p206
        $region14: #{tpu_custom_call.1} parent=11 // pred_check_branch
          %322 = sbr.rel (%p320) target = $region16
        $region15: #{tpu_custom_call.1} parent=11 // pred_region
          %324 = vsyncadd [#allocation6], 0
          %s325 = sshll.u32 %s6, 4
          %s326 = int_to_ptr.hbm [resolvable:$true] %s325
          %s327 = sshll.u32 [#allocation7], 4
          %s328 = int_to_ptr.vmem [resolvable:$true] %s327
          %333 = dma.hbm_to_vmem [thread:$0]  %s326, 2048, %s328, [#allocation6], 128, 128, 8
        $region16: #{tpu_custom_call.1} parent=11 // pred_fallthru
          _
        // Predicated region
        $region17: #{tpu_custom_call.1} parent=11 // pred_check
          %p334 = pneg %p227
        $region18: #{tpu_custom_call.1} parent=11 // pred_check_branch
          %336 = sbr.rel (%p334) target = $region20
        $region19: #{tpu_custom_call.1} parent=11 // pred_region
          _
        $region20: #{tpu_custom_call.1} parent=11 // pred_fallthru
          _
      $region12: #{tpu_custom_call.1} parent=5 // pred_fallthru
        _
      %p337 = scmp.lt.s32.totalorder %s29, 2
      // Predicated region
      $region21: #{tpu_custom_call.1} parent=5 // pred_check
        %p338 = pneg %p337
      $region22: #{tpu_custom_call.1} parent=5 // pred_check_branch
        %340 = sbr.rel (%p338) target = $region24
      $region23: #{tpu_custom_call.1} parent=5 // pred_region
        // Predicated region
        $region25: #{tpu_custom_call.1} parent=23 // pred_check
          %p341 = pneg %p49
        $region26: #{tpu_custom_call.1} parent=23 // pred_check_branch
          %343 = sbr.rel (%p341) target = $region28
        $region27: #{tpu_custom_call.1} parent=23 // pred_region
          %s344 = sand.u32 %s39, 1
          %s345 = scalar_lea.sflag [#allocation3], %s344
          %s346 = sand.u32 %s39, 1
          %s347 = smul.addr %s346, 32
          %s348 = scalar_lea.vmem [#allocation2], %s347
          %s349 = smul.u32 8, %s29
          %351 = vsyncadd %s345, 0
          %s352 = smul.addr %s349, 4
          %s353 = scalar_lea.hbm %s0, %s352
          %s354 = sshll.u32 %s353, 4
          %s355 = int_to_ptr.hbm [resolvable:$true] %s354
          %s356 = sshll.u32 %s348, 4
          %s357 = int_to_ptr.vmem [resolvable:$true] %s356
          %362 = dma.hbm_to_vmem [thread:$0]  %s355, 512, %s357, %s345, 64, 64, 4
        $region28: #{tpu_custom_call.1} parent=23 // pred_fallthru
          _
        // Predicated region
        $region29: #{tpu_custom_call.1} parent=23 // pred_check
          %p363 = pneg %p75
        $region30: #{tpu_custom_call.1} parent=23 // pred_check_branch
          %365 = sbr.rel (%p363) target = $region32
        $region31: #{tpu_custom_call.1} parent=23 // pred_region
          %s366 = sand.u32 %s29, 1
          %s367 = scalar_lea.sflag [#allocation6], %s366
          %s368 = sand.u32 %s65, 1
          %s369 = smul.addr %s368, 32
          %s370 = scalar_lea.vmem [#allocation5], %s369
          %s371 = smul.u32 8, %s29
          %373 = vsyncadd %s367, 0
          %s374 = smul.addr %s371, 4
          %s375 = scalar_lea.hbm %s1, %s374
          %s376 = sshll.u32 %s375, 4
          %s377 = int_to_ptr.hbm [resolvable:$true] %s376
          %s378 = sshll.u32 %s370, 4
          %s379 = int_to_ptr.vmem [resolvable:$true] %s378
          %384 = dma.hbm_to_vmem [thread:$0]  %s377, 512, %s379, %s367, 64, 64, 4
        $region32: #{tpu_custom_call.1} parent=23 // pred_fallthru
          _
        // Predicated region
        $region33: #{tpu_custom_call.1} parent=23 // pred_check
          %p385 = pneg %p101
        $region34: #{tpu_custom_call.1} parent=23 // pred_check_branch
          %387 = sbr.rel (%p385) target = $region36
        $region35: #{tpu_custom_call.1} parent=23 // pred_region
          %p388 = scmp.lt.s32.totalorder %s29, 1
          %s389 = scalar_select %p388, %s29, 1
          %s390 = smul.addr %s389, 4
          %s391 = scalar_lea.vmem %s2, %s390
        $region36: #{tpu_custom_call.1} parent=23 // pred_fallthru
          _
        // Predicated region
        $region37: #{tpu_custom_call.1} parent=23 // pred_check
          %p392 = pneg %p127
        $region38: #{tpu_custom_call.1} parent=23 // pred_check_branch
          %394 = sbr.rel (%p392) target = $region40
        $region39: #{tpu_custom_call.1} parent=23 // pred_region
          %p395 = scmp.lt.s32.totalorder %s29, 1
          %s396 = scalar_select %p395, %s29, 1
          %s397 = smul.addr %s396, 4
          %s398 = scalar_lea.vmem %s3, %s397
        $region40: #{tpu_custom_call.1} parent=23 // pred_fallthru
          _
        // Predicated region
        $region41: #{tpu_custom_call.1} parent=23 // pred_check
          %p399 = pneg %p153
        $region42: #{tpu_custom_call.1} parent=23 // pred_check_branch
          %401 = sbr.rel (%p399) target = $region44
        $region43: #{tpu_custom_call.1} parent=23 // pred_region
          %p402 = scmp.lt.s32.totalorder %s29, 1
          %s403 = scalar_select %p402, %s29, 1
          %s404 = smul.addr %s403, 8
          %s405 = scalar_lea.vmem %s4, %s404
        $region44: #{tpu_custom_call.1} parent=23 // pred_fallthru
          _
        // Predicated region
        $region45: #{tpu_custom_call.1} parent=23 // pred_check
          %p406 = pneg %p179
        $region46: #{tpu_custom_call.1} parent=23 // pred_check_branch
          %408 = sbr.rel (%p406) target = $region48
        $region47: #{tpu_custom_call.1} parent=23 // pred_region
          %p409 = scmp.lt.s32.totalorder %s29, 1
          %s410 = scalar_select %p409, %s29, 1
          %s411 = smul.addr %s410, 8
          %s412 = scalar_lea.vmem %s5, %s411
        $region48: #{tpu_custom_call.1} parent=23 // pred_fallthru
          _
        // Predicated region
        $region49: #{tpu_custom_call.1} parent=23 // pred_check
          %p413 = pneg %p247
        $region50: #{tpu_custom_call.1} parent=23 // pred_check_branch
          %415 = sbr.rel (%p413) target = $region52
        $region51: #{tpu_custom_call.1} parent=23 // pred_region
          %p416 = scmp.lt.s32.totalorder %s29, 1
          %s417 = scalar_select %p416, %s29, 1
          %s418 = smul.addr %s417, 8
          %s419 = scalar_lea.vmem %s8, %s418
        $region52: #{tpu_custom_call.1} parent=23 // pred_fallthru
          _
      $region24: #{tpu_custom_call.1} parent=5 // pred_fallthru
        _
      %p420 = scmp.le.s32.totalorder 1, %s29
      %p421 = scmp.lt.s32.totalorder %s29, 3
      %p422 = pnand %p420, %p421
      %p423 = pneg %p422
      // Predicated region
      $region53: #{tpu_custom_call.1} parent=5 // pred_check
        _
      $region54: #{tpu_custom_call.1} parent=5 // pred_check_branch
        %425 = sbr.rel (%p422) target = $region56
      $region55: #{tpu_custom_call.1} parent=5 // pred_region
        %s426 = ssub.s32 %s29, 1
        %s427 = sand.u32 %s42, 1
        %s428 = scalar_lea.sflag [#allocation3], %s427
        %s429 = sand.u32 %s42, 1
        %s430 = smul.addr %s429, 32
        %s431 = scalar_lea.vmem [#allocation2], %s430
        // Predicated region
        $region57: #{tpu_custom_call.1} parent=55 // pred_check
          %p432 = pneg %p55
        $region58: #{tpu_custom_call.1} parent=55 // pred_check_branch
          %434 = sbr.rel (%p432) target = $region60
        $region59: #{tpu_custom_call.1} parent=55 // pred_region
          %436 = dma.done %s428, 512
        $region60: #{tpu_custom_call.1} parent=55 // pred_fallthru
          _
        %s437 = sand.u32 %s34, 1
        %s438 = scalar_lea.sflag [#allocation6], %s437
        %s439 = sand.u32 %s68, 1
        %s440 = smul.addr %s439, 32
        %s441 = scalar_lea.vmem [#allocation5], %s440
        // Predicated region
        $region61: #{tpu_custom_call.1} parent=55 // pred_check
          %p442 = pneg %p81
        $region62: #{tpu_custom_call.1} parent=55 // pred_check_branch
          %444 = sbr.rel (%p442) target = $region64
        $region63: #{tpu_custom_call.1} parent=55 // pred_region
          %446 = dma.done %s438, 512
        $region64: #{tpu_custom_call.1} parent=55 // pred_fallthru
          _
        // Predicated region
        $region65: #{tpu_custom_call.1} parent=55 // pred_check
          %p447 = pneg %p206
        $region66: #{tpu_custom_call.1} parent=55 // pred_check_branch
          %449 = sbr.rel (%p447) target = $region68
        $region67: #{tpu_custom_call.1} parent=55 // pred_region
          %451 = dma.done [#allocation6], 2048
        $region68: #{tpu_custom_call.1} parent=55 // pred_fallthru
          _
        %s452 = sand.u32 %s42, 1
        %s453 = scalar_lea.sflag [#allocation3], %s452
        %s454 = sand.u32 %s42, 1
        %s455 = smul.addr %s454, 32
        %s456 = scalar_lea.vmem [#allocation2], %s455
        %p457 = pneg %p55
        %p458 = pneg %p52
        %s459 = sand.u32 %s34, 1
        %s460 = scalar_lea.sflag [#allocation6], %s459
        %s461 = sand.u32 %s68, 1
        %s462 = smul.addr %s461, 32
        %s463 = scalar_lea.vmem [#allocation5], %s462
        %p464 = pneg %p81
        %p465 = pneg %p78
        %p466 = scmp.lt.s32.totalorder %s34, 1
        %s467 = scalar_select %p466, %s34, 1
        %s468 = smul.addr %s467, 4
        %s469 = scalar_lea.vmem %s2, %s468
        %p470 = pneg %p107
        %p471 = pneg %p104
        %p472 = scmp.lt.s32.totalorder %s34, 1
        %s473 = scalar_select %p472, %s34, 1
        %s474 = smul.addr %s473, 4
        %s475 = scalar_lea.vmem %s3, %s474
        %p476 = pneg %p133
        %p477 = pneg %p130
        %p478 = scmp.lt.s32.totalorder %s34, 1
        %s479 = scalar_select %p478, %s34, 1
        %s480 = smul.addr %s479, 8
        %s481 = scalar_lea.vmem %s4, %s480
        %p482 = pneg %p159
        %p483 = pneg %p156
        %p484 = scmp.lt.s32.totalorder %s34, 1
        %s485 = scalar_select %p484, %s34, 1
        %s486 = smul.addr %s485, 8
        %s487 = scalar_lea.vmem %s5, %s486
        %p488 = pneg %p185
        %p489 = pneg %p182
        %p490 = pneg %p206
        %p491 = pneg %p203
        %p492 = pneg %p227
        %p493 = pneg %p224
        %p494 = scmp.lt.s32.totalorder %s34, 1
        %s495 = scalar_select %p494, %s34, 1
        %s496 = smul.addr %s495, 8
        %s497 = scalar_lea.vmem %s8, %s496
        %p498 = pneg %p253
        %p499 = pneg %p250
        %p500 = pneg %p279
        %p501 = pneg %p276
        %s502 = sand.u32 %s266, 1
        %s503 = scalar_lea.sflag [#allocation4], %s502
        %s504 = sand.u32 %s266, 1
        %s505 = smul.addr %s504, 8
        %s506 = scalar_lea.vmem [#allocation8], %s505
        %p507 = pneg %p305
        %p508 = pneg %p302
        %s509 = sand.u32 %s292, 1
        %s510 = scalar_lea.sflag [#allocation10], %s509
        %s511 = sand.u32 %s292, 1
        %s512 = smul.addr %s511, 8
        %s513 = scalar_lea.vmem [#allocation9], %s512
        %s514 = smul.u32 8, %s34
        %s515 = smul.u32 8, %s34
        %p516 = scmp.lt.s32.totalorder %s34, 1
        %s517 = scalar_select %p516, %s34, 1
        %s518 = smul.addr %s517, 4
        %s519 = scalar_lea.vmem %s2, %s518
        %p520 = scmp.lt.s32.totalorder %s34, 1
        %s521 = scalar_select %p520, %s34, 1
        %s522 = smul.addr %s521, 4
        %s523 = scalar_lea.vmem %s3, %s522
        %p524 = scmp.lt.s32.totalorder %s34, 1
        %s525 = scalar_select %p524, %s34, 1
        %s526 = smul.addr %s525, 8
        %s527 = scalar_lea.vmem %s4, %s526
        %p528 = scmp.lt.s32.totalorder %s34, 1
        %s529 = scalar_select %p528, %s34, 1
        %s530 = smul.addr %s529, 8
        %s531 = scalar_lea.vmem %s5, %s530
        %p532 = scmp.lt.s32.totalorder %s34, 1
        %s533 = scalar_select %p532, %s34, 1
        %s534 = smul.addr %s533, 8
        %s535 = scalar_lea.vmem %s8, %s534
        %v537 = vld [vmem:[%s519] sm:$0xf]
        %v538 = vld [vmem:[%s431] sm:$0xf]
        %v539 = vld [vmem:[%s431 + $0x4] sm:$0xf]
        %v540 = vld [vmem:[%s431 + $0x8] sm:$0xf]
        %v541 = vld [vmem:[%s431 + $0xc] sm:$0xf]
        %v542 = vld [vmem:[%s431 + $0x10] sm:$0xf]
        %v543 = vld [vmem:[%s431 + $0x14] sm:$0xf]
        %v544 = vld [vmem:[%s431 + $0x18] sm:$0xf]
        %v545 = vld [vmem:[%s431 + $0x1c] sm:$0xf]
        %v554 = vunpack.c.l.b16 %v538
        %v555 = vunpack.c.l.b16 %v539
        %v556 = vunpack.c.l.b16 %v540
        %v557 = vunpack.c.l.b16 %v541
        %v558 = vunpack.c.l.b16 %v542
        %v559 = vunpack.c.l.b16 %v543
        %v560 = vunpack.c.l.b16 %v544
        %v561 = vunpack.c.l.b16 %v545
        %v562 = vpack.c.b16 %v555, %v554
        %v563 = vpack.c.b16 %v557, %v556
        %v564 = vpack.c.b16 %v559, %v558
        %v565 = vpack.c.b16 %v561, %v560
        %vm570 = vcmask 523264
        %v572 = vsel %vm570, %v537, 0
        %574 = vmatpush.bf16.msra.mxu0 0
        %575 = vmatpush.bf16.msra.mxu0 0
        %576 = vmatpush.bf16.msra.mxu0 0
        %577 = vmatpush.bf16.msra.mxu0 0
        %578 = vmatpush.bf16.msra.mxu0 %v565
        %579 = vmatpush.bf16.msra.mxu0 %v564
        %580 = vmatpush.bf16.msra.mxu0 %v563
        %581 = vmatpush.bf16.msra.mxu0 %v562
        %582 = vmatmul.bf16.gmra.mxu0 %v572
        %v583 = vpop.f32.mrf.mxu0
        %v584 = vadd.f32 0.0, %v583
        %v585 = vpop.f32.mrf.mxu0
        %586 = vdwg.mxu0
        %v587 = vld [vmem:[%s523] sm:$0xf]
        %v588 = vld [vmem:[%s441] sm:$0xf]
        %v589 = vld [vmem:[%s441 + $0x4] sm:$0xf]
        %v590 = vld [vmem:[%s441 + $0x8] sm:$0xf]
        %v591 = vld [vmem:[%s441 + $0xc] sm:$0xf]
        %v592 = vld [vmem:[%s441 + $0x10] sm:$0xf]
        %v593 = vld [vmem:[%s441 + $0x14] sm:$0xf]
        %v594 = vld [vmem:[%s441 + $0x18] sm:$0xf]
        %v595 = vld [vmem:[%s441 + $0x1c] sm:$0xf]
        %v604 = vunpack.c.l.b16 %v588
        %v605 = vunpack.c.l.b16 %v589
        %v606 = vunpack.c.l.b16 %v590
        %v607 = vunpack.c.l.b16 %v591
        %v608 = vunpack.c.l.b16 %v592
        %v609 = vunpack.c.l.b16 %v593
        %v610 = vunpack.c.l.b16 %v594
        %v611 = vunpack.c.l.b16 %v595
        %v612 = vpack.c.b16 %v605, %v604
        %v613 = vpack.c.b16 %v607, %v606
        %v614 = vpack.c.b16 %v609, %v608
        %v615 = vpack.c.b16 %v611, %v610
        %v621 = vsel %vm570, %v587, 0
        %623 = vmatpush.bf16.msra.mxu0 0
        %624 = vmatpush.bf16.msra.mxu0 0
        %625 = vmatpush.bf16.msra.mxu0 0
        %626 = vmatpush.bf16.msra.mxu0 0
        %627 = vmatpush.bf16.msra.mxu0 %v615
        %628 = vmatpush.bf16.msra.mxu0 %v614
        %629 = vmatpush.bf16.msra.mxu0 %v613
        %630 = vmatpush.bf16.msra.mxu0 %v612
        %631 = vmatmul.bf16.gmra.mxu0 %v621
        %v632 = vpop.f32.mrf.mxu0
        %v633 = vadd.f32 0.0, %v632
        %v634 = vpop.f32.mrf.mxu0
        %635 = vdwg.mxu0
        %v636 = vld [vmem:[%s527] sm:$0xff]
        %vm637 = vcmask 64512
        %v638 = vsel %vm637, %v636, 0.0
        %639 = vadd.xlane.f32.xlu0 %v638
        %v640 = vpop.xlane.xlu0 %639
        %v641 = vld [vmem:[%s531] sm:$0xff]
        %v642 = vsel %vm637, %v641, 0.0
        %643 = vadd.xlane.f32.xlu0 %v642
        %v644 = vpop.xlane.xlu0 %643
        %v645 = vrcp.pop %v640
        %v646 = vmul.f32 %v640, %v645
        %v647 = vsub.f32 1.0, %v646
        %v648 = vmul.f32 %v645, %v647
        %v649 = vadd.f32 %v645, %v648
        %vm650 = vweird.f32 %v640
        %vm651 = vweird.f32 %v645
        %vm652 = vmor %vm650, %vm651
        %v653 = vsel %vm652, %v645, %v649
        %v654 = vand.u32 2147483647, %v640
        %vm655 = vcmp.eq.f32.partialorder %v654, 8.507059e+37
        %v656 = vand.u32 %v640, 2147483648
        %v657 = vor.u32 1.1754944e-38, %v656
        %v658 = vsel %vm655, %v657, %v653
        %v659 = vmul.f32 %v584, %v658
        %v660 = vrcp.pop %v644
        %v661 = vmul.f32 %v644, %v660
        %v662 = vsub.f32 1.0, %v661
        %v663 = vmul.f32 %v660, %v662
        %v664 = vadd.f32 %v660, %v663
        %vm665 = vweird.f32 %v644
        %vm666 = vweird.f32 %v660
        %vm667 = vmor %vm665, %vm666
        %v668 = vsel %vm667, %v660, %v664
        %v669 = vand.u32 2147483647, %v644
        %vm670 = vcmp.eq.f32.partialorder %v669, 8.507059e+37
        %v671 = vand.u32 %v644, 2147483648
        %v672 = vor.u32 1.1754944e-38, %v671
        %v673 = vsel %vm670, %v672, %v668
        %v674 = vmul.f32 %v633, %v673
        %v675 = vpack.c.bf16 %v659, %v659
        %v676 = vld [vmem:[#allocation7] sm:$0xff]
        %v677 = vld [vmem:[#allocation7 + $0x8] sm:$0xff]
        %v678 = vld [vmem:[#allocation7 + $0x10] sm:$0xff]
        %v679 = vld [vmem:[#allocation7 + $0x18] sm:$0xff]
        %v680 = vld [vmem:[#allocation7 + $0x20] sm:$0xff]
        %v681 = vld [vmem:[#allocation7 + $0x28] sm:$0xff]
        %v682 = vld [vmem:[#allocation7 + $0x30] sm:$0xff]
        %v683 = vld [vmem:[#allocation7 + $0x38] sm:$0xff]
        %v684 = vld [vmem:[#allocation7 + $0x40] sm:$0xff]
        %v685 = vld [vmem:[#allocation7 + $0x48] sm:$0xff]
        %v686 = vld [vmem:[#allocation7 + $0x50] sm:$0xff]
        %v687 = vld [vmem:[#allocation7 + $0x58] sm:$0xff]
        %v688 = vld [vmem:[#allocation7 + $0x60] sm:$0xff]
        %v689 = vld [vmem:[#allocation7 + $0x68] sm:$0xff]
        %v690 = vld [vmem:[#allocation7 + $0x70] sm:$0xff]
        %v691 = vld [vmem:[#allocation7 + $0x78] sm:$0xff]
        %v708 = vunpack.c.l.b16 %v676
        %v709 = vunpack.c.h.b16 %v676
        %v710 = vunpack.c.l.b16 %v677
        %v711 = vunpack.c.h.b16 %v677
        %v712 = vunpack.c.l.b16 %v678
        %v713 = vunpack.c.h.b16 %v678
        %v714 = vunpack.c.l.b16 %v679
        %v715 = vunpack.c.h.b16 %v679
        %v716 = vunpack.c.l.b16 %v680
        %v717 = vunpack.c.h.b16 %v680
        %v718 = vunpack.c.l.b16 %v681
        %v719 = vunpack.c.h.b16 %v681
        %v720 = vunpack.c.l.b16 %v682
        %v721 = vunpack.c.h.b16 %v682
        %v722 = vunpack.c.l.b16 %v683
        %v723 = vunpack.c.h.b16 %v683
        %v724 = vunpack.c.l.b16 %v684
        %v725 = vunpack.c.h.b16 %v684
        %v726 = vunpack.c.l.b16 %v685
        %v727 = vunpack.c.h.b16 %v685
        %v728 = vunpack.c.l.b16 %v686
        %v729 = vunpack.c.h.b16 %v686
        %v730 = vunpack.c.l.b16 %v687
        %v731 = vunpack.c.h.b16 %v687
        %v732 = vunpack.c.l.b16 %v688
        %v733 = vunpack.c.h.b16 %v688
        %v734 = vunpack.c.l.b16 %v689
        %v735 = vunpack.c.h.b16 %v689
        %v736 = vunpack.c.l.b16 %v690
        %v737 = vunpack.c.h.b16 %v690
        %v738 = vunpack.c.l.b16 %v691
        %v739 = vunpack.c.h.b16 %v691
        %v740 = vpack.c.b16 %v710, %v708
        %v741 = vpack.c.b16 %v711, %v709
        %v742 = vpack.c.b16 %v714, %v712
        %v743 = vpack.c.b16 %v715, %v713
        %v744 = vpack.c.b16 %v718, %v716
        %v745 = vpack.c.b16 %v719, %v717
        %v746 = vpack.c.b16 %v722, %v720
        %v747 = vpack.c.b16 %v723, %v721
        %v748 = vpack.c.b16 %v726, %v724
        %v749 = vpack.c.b16 %v727, %v725
        %v750 = vpack.c.b16 %v730, %v728
        %v751 = vpack.c.b16 %v731, %v729
        %v752 = vpack.c.b16 %v734, %v732
        %v753 = vpack.c.b16 %v735, %v733
        %v754 = vpack.c.b16 %v738, %v736
        %v755 = vpack.c.b16 %v739, %v737
        %772 = vmatpush.bf16.msra.mxu0 %v754
        %773 = vmatpush.bf16.msra.mxu0 %v752
        %774 = vmatpush.bf16.msra.mxu0 %v750
        %775 = vmatpush.bf16.msra.mxu0 %v748
        %776 = vmatpush.bf16.msra.mxu0 %v746
        %777 = vmatpush.bf16.msra.mxu0 %v744
        %778 = vmatpush.bf16.msra.mxu0 %v742
        %779 = vmatpush.bf16.msra.mxu0 %v740
        %780 = vmatmul.bf16.gmra.mxu0 %v675
        %v781 = vpop.f32.mrf.mxu0
        %v782 = vadd.f32 0.0, %v781
        %v783 = vpop.f32.mrf.mxu0
        %784 = vdwg.mxu0
        %785 = vmatpush.bf16.msra.mxu0 %v755
        %786 = vmatpush.bf16.msra.mxu0 %v753
        %787 = vmatpush.bf16.msra.mxu0 %v751
        %788 = vmatpush.bf16.msra.mxu0 %v749
        %789 = vmatpush.bf16.msra.mxu0 %v747
        %790 = vmatpush.bf16.msra.mxu0 %v745
        %791 = vmatpush.bf16.msra.mxu0 %v743
        %792 = vmatpush.bf16.msra.mxu0 %v741
        %793 = vmatmul.bf16.gmra.mxu0 %v675
        %v794 = vpop.f32.mrf.mxu0
        %v795 = vadd.f32 0.0, %v794
        %v796 = vpop.f32.mrf.mxu0
        %797 = vdwg.mxu0
        %v798 = vlaneseq
        %v799 = vand.u32 %v798, 127
        %v800 = vmul.f32 %v782, %v674
        %801 = vadd.xlane.f32.xlu0 %v800
        %v802 = vpop.xlane.xlu0 %801
        %vm803 = vcmp.eq.s32.totalorder %v799, 0
        %v804 = vsel %vm803, %v802, 0.0
        %v805 = vmul.f32 %v795, %v674
        %806 = vadd.xlane.f32.xlu0 %v805
        %v807 = vpop.xlane.xlu0 %806
        %vm808 = vcmp.eq.s32.totalorder %v799, 1
        %v809 = vsel %vm808, %v807, %v804
        %v810 = vld [vmem:[%s7] sm:$0x1]
        %v812 = vperm.slane %v810, 0
        %v814 = vadd.f32 %v809, %v812
        %815 = vst [vmem:[%s506] sm:$0xff] %v814
        %vm816 = vcmp.lt.s32.totalorder %v799, 2
        %v817 = vld [vmem:[%s535] sm:$0xff]
        %v818 = vsel %vm816, %v814, -inf
        %819 = vmax.xlane.f32.xlu0 %v818
        %v820 = vpop.xlane.xlu0 %819
        %v821 = vsub.f32 %v814, %v820
        %v822 = vmul.f32 %v821, 1.442695
        %v823 = vpow.pop %v822
        %v824 = vsel %vm816, %v823, 0.0
        %825 = vadd.xlane.f32.xlu0 %v824
        %v826 = vpop.xlane.xlu0 %825
        %v827 = vlog2.pop %v826
        %v828 = vmul.f32 %v827, 0.6931472
        %v829 = vadd.f32 %v820, %v828
        %830 = vset.pattern.permute.xlu0 0
        %831 = vperm.xlu0 %830, %v817
        %v832 = vpop.permute.xlu0 %831
        %vm833 = vcmp.eq.s32.totalorder %v799, %v832
        %v834 = vsel %vm833, 1, 0
        %v835 = vcvt.s32.f32 %v834
        %v836 = vmul.f32 %v835, %v814
        %837 = vadd.xlane.f32.xlu0 %v836
        %v838 = vpop.xlane.xlu0 %837
        %v839 = vsub.f32 %v829, %v838
        %840 = vst [vmem:[%s513] sm:$0xff] %v839
        %s841 = sand.u32 %s266, 1
        %s842 = scalar_lea.sflag [#allocation4], %s841
        %s843 = sand.u32 %s266, 1
        %s844 = smul.addr %s843, 8
        %s845 = scalar_lea.vmem [#allocation8], %s844
        %s846 = sand.u32 %s292, 1
        %s847 = scalar_lea.sflag [#allocation10], %s846
        %s848 = sand.u32 %s292, 1
        %s849 = smul.addr %s848, 8
        %s850 = scalar_lea.vmem [#allocation9], %s849
        // Predicated region
        $region69: #{tpu_custom_call.1} parent=55 // pred_check
          %p851 = pneg %p276
        $region70: #{tpu_custom_call.1} parent=55 // pred_check_branch
          %853 = sbr.rel (%p851) target = $region72
        $region71: #{tpu_custom_call.1} parent=55 // pred_region
          %855 = vsyncadd %s842, 0
          %s856 = smul.addr %s34, 8
          %s857 = scalar_lea.hbm %s9, %s856
          %s859 = sshll.u32 %s845, 4
          %s860 = int_to_ptr.vmem [resolvable:$true] %s859
          %s861 = sshll.u32 %s857, 4
          %s862 = int_to_ptr.hbm [resolvable:$true] %s861
          %864 = dma.vmem_to_hbm [thread:$0]  %s860, 128, %s862, %s842
        $region72: #{tpu_custom_call.1} parent=55 // pred_fallthru
          _
        // Predicated region
        $region73: #{tpu_custom_call.1} parent=55 // pred_check
          %p865 = pneg %p302
        $region74: #{tpu_custom_call.1} parent=55 // pred_check_branch
          %867 = sbr.rel (%p865) target = $region76
        $region75: #{tpu_custom_call.1} parent=55 // pred_region
          %869 = vsyncadd %s847, 0
          %s870 = smul.addr %s34, 8
          %s871 = scalar_lea.hbm %s10, %s870
          %s873 = sshll.u32 %s850, 4
          %s874 = int_to_ptr.vmem [resolvable:$true] %s873
          %s875 = sshll.u32 %s871, 4
          %s876 = int_to_ptr.hbm [resolvable:$true] %s875
          %878 = dma.vmem_to_hbm [thread:$0]  %s874, 128, %s876, %s847
        $region76: #{tpu_custom_call.1} parent=55 // pred_fallthru
          _
      $region56: #{tpu_custom_call.1} parent=5 // pred_fallthru
        _
      %p879 = scmp.le.s32.totalorder 2, %s29
      // Predicated region
      $region77: #{tpu_custom_call.1} parent=5 // pred_check
        %p880 = pneg %p879
      $region78: #{tpu_custom_call.1} parent=5 // pred_check_branch
        %882 = sbr.rel (%p880) target = $region80
      $region79: #{tpu_custom_call.1} parent=5 // pred_region
        %s883 = ssub.s32 %s29, 2
        // Predicated region
        $region81: #{tpu_custom_call.1} parent=79 // pred_check
          %p884 = pneg %p282
        $region82: #{tpu_custom_call.1} parent=79 // pred_check_branch
          %886 = sbr.rel (%p884) target = $region84
        $region83: #{tpu_custom_call.1} parent=79 // pred_region
          %s887 = sand.u32 %s267, 1
          %s888 = scalar_lea.sflag [#allocation4], %s887
          %s889 = sand.u32 %s267, 1
          %s890 = smul.addr %s889, 8
          %s891 = scalar_lea.vmem [#allocation8], %s890
          %893 = dma.done %s888, 128
        $region84: #{tpu_custom_call.1} parent=79 // pred_fallthru
          _
        // Predicated region
        $region85: #{tpu_custom_call.1} parent=79 // pred_check
          %p894 = pneg %p308
        $region86: #{tpu_custom_call.1} parent=79 // pred_check_branch
          %896 = sbr.rel (%p894) target = $region88
        $region87: #{tpu_custom_call.1} parent=79 // pred_region
          %s897 = sand.u32 %s293, 1
          %s898 = scalar_lea.sflag [#allocation10], %s897
          %s899 = sand.u32 %s293, 1
          %s900 = smul.addr %s899, 8
          %s901 = scalar_lea.vmem [#allocation9], %s900
          %903 = dma.done %s898, 128
        $region88: #{tpu_custom_call.1} parent=79 // pred_fallthru
          _
      $region80: #{tpu_custom_call.1} parent=5 // pred_fallthru
        _
    $region6: #{tpu_custom_call.1} parent=1 // loop_footer
      %s33 = sadd.s32 1, %s29
    $region7: #{tpu_custom_call.1} parent=1 // loop_footer_branch
      %28 = sbr.rel target = $region3
    $region8: #{tpu_custom_call.1} parent=1 // loop_exit
      _
    %904 = vsyncpa [#allocation3], 1
    %s905 = scalar_lea.sflag [#allocation3], 1
    %906 = vsyncpa %s905, 1
    %907 = vsyncpa [#allocation6], 1
    %s908 = scalar_lea.sflag [#allocation6], 1
    %909 = vsyncpa %s908, 1
    %910 = vsyncpa [#allocation4], 1
    %s911 = scalar_lea.sflag [#allocation4], 1
    %912 = vsyncpa %s911, 1
    %913 = vsyncpa [#allocation10], 1
    %s914 = scalar_lea.sflag [#allocation10], 1
    %915 = vsyncpa %s914, 1

</llo_original>
